<compile_context>
chip_gen: v7x
topology: tpu7x:2x2x1
jax: 0.10.0
libtpu: 0.0.40
codegen_flags: <defaults>
</compile_context>

<pallas_src>
import jax
import jax.numpy as jnp
from jax.experimental import pallas as pl
from jax.experimental.pallas import tpu as pltpu

_LANE = 128
_SUBLANE = 8


def _copy_kernel(x_ref, o_ref):
    # Both refs are (b_tile, c_tile, t_tile) VMEM tiles; the channel shuffle is
    # carried entirely by the BlockSpec index_maps, so the body is a pure
    # lane-dense full-tile copy.
    o_ref[...] = x_ref[...]


def _round_up(n: int, m: int) -> int:
    return ((n + m - 1) // m) * m


def _divisors(n: int):
    ds = set()
    d = 1
    while d * d <= n:
        if n % d == 0:
            ds.add(d)
            ds.add(n // d)
        d += 1
    return sorted(ds)


def group_shuffle(x: jax.Array, groups: int, *,
                  vmem_budget_bytes: int = 16 * 1024 * 1024,
                  min_block_bytes: int = 1 << 20) -> jax.Array:
    """Pallas implementation of GroupShuffle.forward on an NCT tensor."""
    assert x.ndim == 3, "expected (batch, channels, time)"
    B, C, T = x.shape
    assert C % groups == 0, "channels must be divisible by groups"
    cpg = C // groups
    itemsize = jnp.dtype(x.dtype).itemsize

    # Minimal lane padding only: T -> next multiple of 128. No padding when T
    # is already lane-aligned (avoids extra full HBM pad/slice passes).
    Tp = _round_up(T, _LANE)

    # Budget per block: in + out, double-buffered => 4 live blocks.
    per_block_cap = max(_LANE * _SUBLANE * itemsize, vmem_budget_bytes // 4)

    # --- channel tile: full cpg unless even a (cpg, 128) block blows the cap.
    c_tile = cpg
    if cpg * _LANE * itemsize > per_block_cap:
        best = None
        for d in _divisors(cpg):
            if d % _SUBLANE == 0 and d * _LANE * itemsize <= per_block_cap:
                best = d if best is None else max(best, d)
        if best is not None:
            c_tile = best
        # TODO(synk): cpg with no multiple-of-8 divisor under the budget falls
        # back to a single oversized channel block (vmem_limit gets headroom).
    nc = cpg // c_tile

    # --- time tile: largest multiple of 128 dividing Tp that fits the cap.
    t_cap = max(_LANE, (per_block_cap // (c_tile * itemsize)) // _LANE * _LANE)
    t_tile = _LANE
    for d in _divisors(Tp // _LANE):
        cand = d * _LANE
        if cand <= t_cap:
            t_tile = max(t_tile, cand)
    nt = Tp // t_tile

    # --- batch folding: grow the block toward min_block_bytes, within the cap.
    base_bytes = c_tile * t_tile * itemsize
    b_tile = 1
    for d in _divisors(B):
        if d * base_bytes <= per_block_cap:
            b_tile = d
            if d * base_bytes >= min_block_bytes:
                break
        else:
            break
    nb = B // b_tile

    # Keep at least 2 grid steps so both v7x TensorCores get work (only the
    # degenerate groups==1 case can collapse to a single step).
    if nb * groups * nc * nt == 1:
        if Tp > _LANE:
            t_tile = max(d * _LANE for d in _divisors(Tp // _LANE)
                         if d * _LANE < Tp)
            nt = Tp // t_tile
        elif b_tile > 1:
            b_tile = max(d for d in _divisors(B) if d < B)
            nb = B // b_tile

    block_bytes = b_tile * c_tile * t_tile * itemsize
    vmem_limit = max(vmem_budget_bytes * 5 // 4, 4 * block_bytes + (2 << 20))
    vmem_limit = min(vmem_limit, 64 * 1024 * 1024)

    # View input as (B, G, Cpg, Tp): each group's channels form a dense slab.
    x4 = x.reshape(B, groups, cpg, T)
    if Tp != T:
        # TODO(synk): a fully pad-free ragged-T path needs a (B,cpg,G,T) output
        # view with a size-1 second-minor block; kept the lane-aligned form.
        x4 = jnp.pad(x4, ((0, 0), (0, 0), (0, 0), (0, Tp - T)))

    nt_final = nt

    out3 = pl.pallas_call(
        _copy_kernel,
        out_shape=jax.ShapeDtypeStruct((B, cpg, groups * Tp), x.dtype),
        grid=(nb, groups, nc, nt),
        in_specs=[
            # (b_tile, c_tile, t_tile) source tile = group g's contiguous
            # channel slab (G dim squeezed out).
            pl.BlockSpec((b_tile, None, c_tile, t_tile),
                         lambda b, g, jc, t: (b, g, jc, t)),
        ],
        # Destination tile lands at columns [g*Tp + t*t_tile, ...) of the
        # (B, Cpg, G*Tp) output view -> out3[b, j, g*Tp + t] = x[b, g*cpg+j, t].
        out_specs=pl.BlockSpec(
            (b_tile, c_tile, t_tile),
            lambda b, g, jc, t, _nt=nt_final: (b, jc, g * _nt + t)),
        compiler_params=pltpu.CompilerParams(
            dimension_semantics=("parallel", "parallel", "parallel", "parallel"),
            vmem_limit_bytes=int(vmem_limit),
        ),
        cost_estimate=pl.CostEstimate(
            flops=0, transcendentals=0,
            bytes_accessed=2 * B * C * Tp * itemsize),
    )(x4)

    # (B, Cpg, G*Tp) -> (B, Cpg*G, Tp): channel index = j*G + g (the shuffle).
    # This merge/split reshape is contiguity-preserving, i.e. free.
    out = out3.reshape(B, C, Tp)
    if Tp != T:
        out = out[:, :, :T]
    return out


def _reference(x, groups):
    B, C, T = x.shape
    cpg = C // groups
    return x.reshape(B, groups, cpg, T).transpose(0, 2, 1, 3).reshape(B, C, T)


if __name__ == "__main__":
    key = jax.random.PRNGKey(0)

    # Small shapes consistent with the module: batch=2, channels=8, seq=64,
    # groups=2 (=> channels_per_group=4).  Exercises the lane-padded path.
    B, C, T, groups = 2, 8, 64, 2
    x = jax.random.normal(key, (B, C, T), dtype=jnp.float32)
    out = jax.block_until_ready(group_shuffle(x, groups))
    assert out.shape == x.shape and out.dtype == x.dtype
    assert jnp.allclose(out, _reference(x, groups)), "mismatch (padded path)"

    # Second tiny case: lane-aligned T (no pad/slice) and a different group
    # count, exercising the pad-free fast path.
    B2, C2, T2, groups2 = 2, 8, 256, 4
    x2 = jax.random.normal(jax.random.PRNGKey(0), (B2, C2, T2), dtype=jnp.float32)
    out2 = jax.block_until_ready(group_shuffle(x2, groups2))
    assert jnp.allclose(out2, _reference(x2, groups2)), "mismatch (aligned path)"

    print("KERNEL_OK")
</pallas_src>

<mosaic_0001>
module attributes {stable_mosaic.version = 11 : i64} {
  func.func @_copy_kernel(%arg0: i32, %arg1: i32, %arg2: i32, %arg3: i32, %arg4: memref<2x1x4x128xf32, #tpu.memory_space<vmem>>, %arg5: memref<2x4x128xf32, #tpu.memory_space<vmem>>) attributes {dimension_semantics = [#tpu.dimension_semantics<parallel>, #tpu.dimension_semantics<parallel>, #tpu.dimension_semantics<parallel>, #tpu.dimension_semantics<parallel>], iteration_bounds = array<i64: 1, 2, 1, 1>, scalar_prefetch = 0 : i64, scratch_operands = 0 : i64, tpu.core_type = #tpu.core_type<tc>, window_params = [{transform_indices = @transform_0, window_bounds = array<i64: 2, 1, 4, 128>}, {transform_indices = @transform_1, window_bounds = array<i64: 2, 4, 128>}]} {
    %c0 = arith.constant 0 : index
    %c0_0 = arith.constant 0 : index
    %c0_1 = arith.constant 0 : index
    %c0_2 = arith.constant 0 : index
    %0 = vector.load %arg4[%c0, %c0_0, %c0_1, %c0_2] : memref<2x1x4x128xf32, #tpu.memory_space<vmem>>, vector<2x1x4x128xf32>
    %1 = vector.shape_cast %0 : vector<2x1x4x128xf32> to vector<2x4x128xf32>
    %c0_3 = arith.constant 0 : index
    %c0_4 = arith.constant 0 : index
    %c0_5 = arith.constant 0 : index
    %2 = vector.load %arg5[%c0_3, %c0_4, %c0_5] : memref<2x4x128xf32, #tpu.memory_space<vmem>>, vector<2x4x128xf32>
    tpu.vector_store %arg5[%c0_3, %c0_4, %c0_5], %1 {strides = array<i32>} : memref<2x4x128xf32, #tpu.memory_space<vmem>>, vector<2x4x128xf32>,
    return
  }
  func.func @transform_0(%arg0: i32, %arg1: i32, %arg2: i32, %arg3: i32) -> (i32, i32, i32, i32) {
    %c0_i32 = arith.constant 0 : i32
    return %arg0, %arg1, %arg2, %arg3 : i32, i32, i32, i32
  }
  func.func @transform_1(%arg0: i32, %arg1: i32, %arg2: i32, %arg3: i32) -> (i32, i32, i32) {
    %c1_i32 = arith.constant 1 : i32
    %0 = arith.muli %arg1, %c1_i32 : i32
    %1 = arith.addi %0, %arg3 : i32
    %c0_i32 = arith.constant 0 : i32
    return %arg0, %arg2, %1 : i32, i32, i32
  }
}

</mosaic_0001>

<llo_original>
// kernel: tpu_custom_call.1
$region0: #{tpu_custom_call.1}
  #allocation0 [shape = 'u32[]', space=smem, size = 0x4, offset = 0x4, fixed_abs, tag = 'smem constant byte address 0x4 - core index']
  #allocation1 [shape = 'u32[144,128]{1,0:T(1,128)}', space=vmem, size = 0x12000, scoped, tag = 'internal scratch']
  %s0 = inlined_call_operand.hbm [shape: f32[2,2,4,128], index: 0, kind: input, shape index: {}]
  %s1 = inlined_call_operand.hbm [shape: f32[2,4,256], index: 1, kind: output, shape index: {}]
  %s2 = sld [smem:[#allocation0]]
  $region41: #{tpu_custom_call.1} parent=0
    _
  %s4 = ssub.s32 1, %s2
  %s5 = scalar_select 0, %s4, %s2
  $region1: #{tpu_custom_call.1} parent=0
    #allocation2 [shape = 'u8[8192]{0}', space=vmem, size = 0x2000, scoped, tag = 'input window, operand 0']
    #allocation3 [shape = 's32[2]{0}', space=sflag, size = 0x8, scoped, tag = 'scoped memory for tpu_custom_call.1']
    #allocation4 [shape = 's32[2]{0}', space=sflag, size = 0x8, scoped, tag = 'scoped memory for tpu_custom_call.1']
    #allocation5 [shape = 'u8[8192]{0}', space=vmem, size = 0x2000, scoped, tag = 'output window, operand 0']
    %6 = vsyncpa [#allocation3], 0
    %s7 = scalar_lea.sflag [#allocation3], 1
    %8 = vsyncpa %s7, 0
    %9 = vsyncpa [#allocation4], 0
    %s10 = scalar_lea.sflag [#allocation4], 1
    %11 = vsyncpa %s10, 0
    loop: start=0, step=1, limit=4
    $region2: #{tpu_custom_call.1} parent=1 // loop_pre_header
      _
    $region3: #{tpu_custom_call.1} parent=1 // loop_header
      %s13 = sphi 0, %s17
      %p14 = scmp.ge.s32.totalorder %s13, 4
      %s20 = sphi 0, %s46
      %s21 = sphi 0, %s42
      %s22 = sphi 0, %s38
      %s23 = sphi 0, %s34
      %s24 = sphi 0, %s20
      %s25 = sphi 0, %s21
      %s26 = sphi 0, %s22
      %s27 = sphi 0, %s23
      %s28 = sphi 0, %s24
      %s29 = sphi 0, %s25
      %s30 = sphi 0, %s26
      %s31 = sphi 0, %s27
      %s55 = sphi 0, %s57
      %s58 = sphi 0, %s55
      %s59 = sphi 0, %s58
      %s75 = sphi 0, %s59
      %s87 = sphi 0, %s89
      %s90 = sphi 0, %s87
      %s91 = sphi 0, %s90
      %s107 = sphi 0, %s91
    $region4: #{tpu_custom_call.1} parent=1 // loop_header_branch
      %16 = sbr.rel (%p14) target = $region8
    $region5: #{tpu_custom_call.1} parent=1 // loop_body
      %s18 = ssub.s32 %s13, 1
      %s19 = ssub.s32 %s13, 2
      %s32 = sadd.s32 1, %s23
      %p33 = scmp.ge.s32.totalorder %s32, 1
      %s34 = scalar_select %p33, 0, %s32
      %s35 = sadd.s32 1, %s22
      %s36 = scalar_select %p33, %s35, %s22
      %p37 = scmp.ge.s32.totalorder %s36, 1
      %s38 = scalar_select %p37, 0, %s36
      %s39 = sadd.s32 1, %s21
      %s40 = scalar_select %p37, %s39, %s21
      %p41 = scmp.ge.s32.totalorder %s40, 2
      %s42 = scalar_select %p41, 0, %s40
      %s43 = sadd.s32 1, %s20
      %s44 = scalar_select %p41, %s43, %s20
      %p45 = scmp.ge.s32.totalorder %s44, 1
      %s46 = scalar_select %p45, 0, %s44
      %s47 = ssub.s32 %s20, %s46
      %s48 = ssub.s32 %s21, %s42
      %s49 = sor.u32 %s47, %s48
      %s50 = ssub.s32 %s22, %s38
      %s51 = sor.u32 %s49, %s50
      %s52 = ssub.s32 %s23, %s34
      %s53 = sor.u32 %s51, %s52
      %p54 = scmp.eq.s32.totalorder %s53, 0
      %s56 = sadd.s32 %s55, 1
      %s57 = scalar_select %p54, %s55, %s56
      %p60 = pneg %p54
      %p61 = scmp.eq.s32.totalorder %s13, 1
      %p62 = por %p60, %p61
      %p63 = scmp.ne.s32.totalorder %s55, %s58
      %p64 = scmp.eq.s32.totalorder %s13, 0
      %p65 = por %p63, %p64
      %p66 = scmp.ne.s32.totalorder %s55, %s58
      %p67 = scmp.eq.s32.totalorder %s18, 1
      %p68 = por %p66, %p67
      %p69 = scmp.ne.s32.totalorder %s58, %s59
      %p70 = scmp.eq.s32.totalorder %s18, 0
      %p71 = por %p69, %p70
      %p72 = scmp.ne.s32.totalorder %s58, %s59
      %p73 = scmp.eq.s32.totalorder %s19, 1
      %p74 = por %p72, %p73
      %p76 = scmp.ne.s32.totalorder %s59, %s75
      %p77 = scmp.eq.s32.totalorder %s19, 0
      %p78 = por %p76, %p77
      %s79 = sadd.s32 %s21, %s23
      %s80 = sadd.s32 %s42, %s34
      %s81 = ssub.s32 %s20, %s46
      %s82 = ssub.s32 %s22, %s38
      %s83 = sor.u32 %s81, %s82
      %s84 = ssub.s32 %s79, %s80
      %s85 = sor.u32 %s83, %s84
      %p86 = scmp.eq.s32.totalorder %s85, 0
      %s88 = sadd.s32 %s87, 1
      %s89 = scalar_select %p86, %s87, %s88
      %p92 = pneg %p86
      %p93 = scmp.eq.s32.totalorder %s13, 1
      %p94 = por %p92, %p93
      %p95 = scmp.ne.s32.totalorder %s87, %s90
      %p96 = scmp.eq.s32.totalorder %s13, 0
      %p97 = por %p95, %p96
      %p98 = scmp.ne.s32.totalorder %s87, %s90
      %p99 = scmp.eq.s32.totalorder %s18, 1
      %p100 = por %p98, %p99
      %p101 = scmp.ne.s32.totalorder %s90, %s91
      %p102 = scmp.eq.s32.totalorder %s18, 0
      %p103 = por %p101, %p102
      %p104 = scmp.ne.s32.totalorder %s90, %s91
      %p105 = scmp.eq.s32.totalorder %s19, 1
      %p106 = por %p104, %p105
      %p108 = scmp.ne.s32.totalorder %s91, %s107
      %p109 = scmp.eq.s32.totalorder %s19, 0
      %p110 = por %p108, %p109
      %p111 = scmp.le.s32.totalorder 1, %s13
      %p112 = scmp.lt.s32.totalorder %s13, 3
      %p113 = pnand %p111, %p112
      %p114 = pneg %p113
      // Predicated region
      $region9: #{tpu_custom_call.1} parent=5 // pred_check
        _
      $region10: #{tpu_custom_call.1} parent=5 // pred_check_branch
        %116 = sbr.rel (%p113) target = $region12
      $region11: #{tpu_custom_call.1} parent=5 // pred_region
        %s117 = ssub.s32 %s13, 1
      $region12: #{tpu_custom_call.1} parent=5 // pred_fallthru
        _
      %p118 = scmp.lt.s32.totalorder %s13, 2
      // Predicated region
      $region13: #{tpu_custom_call.1} parent=5 // pred_check
        %p119 = pneg %p118
      $region14: #{tpu_custom_call.1} parent=5 // pred_check_branch
        %121 = sbr.rel (%p119) target = $region16
      $region15: #{tpu_custom_call.1} parent=5 // pred_region
        // Predicated region
        $region17: #{tpu_custom_call.1} parent=15 // pred_check
          %p122 = pneg %p65
        $region18: #{tpu_custom_call.1} parent=15 // pred_check_branch
          %124 = sbr.rel (%p122) target = $region20
        $region19: #{tpu_custom_call.1} parent=15 // pred_region
          %s125 = sand.u32 %s55, 1
          %s126 = scalar_lea.sflag [#allocation3], %s125
          %s127 = sand.u32 %s55, 1
          %s128 = smul.addr %s127, 8
          %s129 = scalar_lea.vmem [#allocation2], %s128
          %s130 = smul.u32 2, %s20
          %s132 = ssub.s32 128, 128
          %133 = vsyncadd %s126, %s132
          %s134 = sadd.s32 %s23, %s22
          %s135 = sadd.s32 %s134, %s21
          %s136 = smul.addr %s130, 2
          %s137 = sadd.s32 %s135, %s136
          %s138 = smul.addr %s137, 64
          %s139 = scalar_lea.hbm %s0, %s138
          %s140 = sshll.u32 %s129, 4
          %s141 = int_to_ptr.vmem [resolvable:$true] %s140
          %146 = dma.hbm_to_vmem [thread:$0]  %s139, 128, %s141, %s126, 128, 64, 4
        $region20: #{tpu_custom_call.1} parent=15 // pred_fallthru
          _
      $region16: #{tpu_custom_call.1} parent=5 // pred_fallthru
        _
      %p147 = scmp.le.s32.totalorder 1, %s13
      %p148 = scmp.lt.s32.totalorder %s13, 3
      %p149 = pnand %p147, %p148
      %p150 = pneg %p149
      // Predicated region
      $region21: #{tpu_custom_call.1} parent=5 // pred_check
        _
      $region22: #{tpu_custom_call.1} parent=5 // pred_check_branch
        %152 = sbr.rel (%p149) target = $region24
      $region23: #{tpu_custom_call.1} parent=5 // pred_region
        %s153 = ssub.s32 %s13, 1
        %s154 = sand.u32 %s58, 1
        %s155 = scalar_lea.sflag [#allocation3], %s154
        %s156 = sand.u32 %s58, 1
        %s157 = smul.addr %s156, 8
        %s158 = scalar_lea.vmem [#allocation2], %s157
        // Predicated region
        $region25: #{tpu_custom_call.1} parent=23 // pred_check
          %p159 = pneg %p71
        $region26: #{tpu_custom_call.1} parent=23 // pred_check_branch
          %161 = sbr.rel (%p159) target = $region28
        $region27: #{tpu_custom_call.1} parent=23 // pred_region
          %162 = dma.done %s155, 128
        $region28: #{tpu_custom_call.1} parent=23 // pred_fallthru
          _
        %s163 = sand.u32 %s58, 1
        %s164 = scalar_lea.sflag [#allocation3], %s163
        %s165 = sand.u32 %s58, 1
        %s166 = smul.addr %s165, 8
        %s167 = scalar_lea.vmem [#allocation2], %s166
        %p168 = pneg %p71
        %p169 = pneg %p68
        %p170 = pneg %p103
        %p171 = pneg %p100
        %s172 = sand.u32 %s90, 1
        %s173 = scalar_lea.sflag [#allocation4], %s172
        %s174 = sand.u32 %s90, 1
        %s175 = smul.addr %s174, 8
        %s176 = scalar_lea.vmem [#allocation5], %s175
        %s177 = smul.u32 2, %s24
        %s178 = sadd.s32 %s25, %s27
        %s179 = smul.u32 2, %s24
        %v180 = vld [vmem:[%s158] sm:$0xf]
        %v181 = vld [vmem:[%s158 + $0x4] sm:$0xf]
        %182 = vst [vmem:[%s176] sm:$0xf] %v180
        %183 = vst [vmem:[%s176 + $0x4] sm:$0xf] %v181
        %s184 = sand.u32 %s90, 1
        %s185 = scalar_lea.sflag [#allocation4], %s184
        %s186 = sand.u32 %s90, 1
        %s187 = smul.addr %s186, 8
        %s188 = scalar_lea.vmem [#allocation5], %s187
        // Predicated region
        $region29: #{tpu_custom_call.1} parent=23 // pred_check
          %p189 = pneg %p100
        $region30: #{tpu_custom_call.1} parent=23 // pred_check_branch
          %191 = sbr.rel (%p189) target = $region32
        $region31: #{tpu_custom_call.1} parent=23 // pred_region
          %s192 = sadd.s32 %s25, %s27
          %s193 = smul.u32 2, %s24
          %s195 = ssub.s32 128, 128
          %196 = vsyncadd %s185, %s195
          %s197 = smul.addr %s26, 2
          %s198 = sadd.s32 %s192, %s197
          %s199 = smul.addr %s193, 2
          %s200 = sadd.s32 %s198, %s199
          %s201 = smul.addr %s200, 64
          %s202 = scalar_lea.hbm %s1, %s201
          %s203 = sshll.u32 %s188, 4
          %s204 = int_to_ptr.vmem [resolvable:$true] %s203
          %209 = dma.vmem_to_hbm [thread:$0]  %s204, 128, %s202, %s185, 64, 128, 4
        $region32: #{tpu_custom_call.1} parent=23 // pred_fallthru
          _
      $region24: #{tpu_custom_call.1} parent=5 // pred_fallthru
        _
      %p210 = scmp.le.s32.totalorder 2, %s13
      // Predicated region
      $region33: #{tpu_custom_call.1} parent=5 // pred_check
        %p211 = pneg %p210
      $region34: #{tpu_custom_call.1} parent=5 // pred_check_branch
        %213 = sbr.rel (%p211) target = $region36
      $region35: #{tpu_custom_call.1} parent=5 // pred_region
        %s214 = ssub.s32 %s13, 2
        // Predicated region
        $region37: #{tpu_custom_call.1} parent=35 // pred_check
          %p215 = pneg %p106
        $region38: #{tpu_custom_call.1} parent=35 // pred_check_branch
          %217 = sbr.rel (%p215) target = $region40
        $region39: #{tpu_custom_call.1} parent=35 // pred_region
          %s218 = sand.u32 %s91, 1
          %s219 = scalar_lea.sflag [#allocation4], %s218
          %s220 = sand.u32 %s91, 1
          %s221 = smul.addr %s220, 8
          %s222 = scalar_lea.vmem [#allocation5], %s221
          %223 = dma.done %s219, 128
        $region40: #{tpu_custom_call.1} parent=35 // pred_fallthru
          _
      $region36: #{tpu_custom_call.1} parent=5 // pred_fallthru
        _
    $region6: #{tpu_custom_call.1} parent=1 // loop_footer
      %s17 = sadd.s32 1, %s13
    $region7: #{tpu_custom_call.1} parent=1 // loop_footer_branch
      %12 = sbr.rel target = $region3
    $region8: #{tpu_custom_call.1} parent=1 // loop_exit
      _
    %224 = vsyncpa [#allocation3], 1
    %s225 = scalar_lea.sflag [#allocation3], 1
    %226 = vsyncpa %s225, 1
    %227 = vsyncpa [#allocation4], 1
    %s228 = scalar_lea.sflag [#allocation4], 1
    %229 = vsyncpa %s228, 1

</llo_original>
